<compile_context>
chip_gen: v7x
topology: tpu7x:2x2x1
jax: 0.10.0
libtpu: 0.0.40
codegen_flags: <defaults>
</compile_context>

<pallas_src>
import functools

import jax
import jax.numpy as jnp
from jax.experimental import pallas as pl
from jax.experimental.pallas import tpu as pltpu

_LANE = 128
_TB_MAX = 512          # batch-tile rows
_NEG_BIG = -1e30       # bias for padded logit lanes (exp underflows to 0)


def _round_up(x, m):
    return (x + m - 1) // m * m


@functools.lru_cache(maxsize=None)
def _vmem_cap_bytes():
    """Physical VMEM per core (generation-aware), with headroom for Mosaic."""
    phys = 64 * 1024 * 1024  # conservative default = v7x per-TC VMEM
    try:
        info = pltpu.get_tpu_info()
        phys = int(getattr(info, "vmem_capacity_bytes", phys))
    except Exception:
        pass
    return (phys // 8) * 7   # leave ~1/8 headroom for internal scratch


def _vmem_limit_bytes(tb, i, h_pad, o_pad):
    """Resident weights (single-buffered) + double-buffered tiles + acts."""
    weights = i * 2 * h_pad * 2 + h_pad * o_pad * 2        # bf16, Buffered(1)
    biases = (2 * h_pad + h_pad + o_pad) * 4               # f32, Buffered(1)
    tiles = 2 * (tb * i * 4 + tb * o_pad * 4)              # 2x-buffered x / out
    acts = tb * (2 * h_pad + h_pad + o_pad) * 4            # in-flight intermediates
    est = weights + biases + tiles + acts
    return int(min(_vmem_cap_bytes(), max(32 * 1024 * 1024, 2 * est)))


def actor_policy_kernel(
    x_ref,        # (TB, I)          f32 (cast to bf16 in-kernel)
    wa_ref,       # (I, 2*H_pad)     bf16  [w_in@w1 | w_in@w2], zero-padded halves
    ba_ref,       # (1, 2*H_pad)     f32   [b_in@w1+b1+beta | b_in@w2+b2]
    gamma_ref,    # (1, H_pad)       f32   (zero on padded lanes)
    w_out_ref,    # (H_pad, O_pad)   bf16  (zero-padded rows / cols)
    b_out_ref,    # (1, O_pad)       f32   (-1e30 on padded cols)
    o_ref,        # (TB, O_pad)      f32
    *, hidden_size, h_pad,
):
    # Single fused matmul: x @ [w_in@w1 | w_in@w2]  (bf16 MXU, f32 acc).
    xb = x_ref[...].astype(wa_ref.dtype)
    x12 = jnp.dot(xb, wa_ref[...],
                  preferred_element_type=jnp.float32) + ba_ref[...]

    x1b = x12[:, :h_pad]      # lin1(inl(x)) + b1 + beta   (lane-aligned view)
    x2 = x12[:, h_pad:]       # lin2(inl(x)) + b2 ; dropout -> identity

    # LayerNorm over the true H lanes (padded lanes of x2 are exactly 0), f32.
    inv_h = 1.0 / hidden_size
    mean = jnp.sum(x2, axis=-1, keepdims=True) * inv_h
    c = x2 - mean
    if hidden_size != h_pad:  # static branch: mask padded lanes out of var
        lane = jax.lax.broadcasted_iota(jnp.int32, c.shape, 1)
        c = jnp.where(lane < hidden_size, c, 0.0)
    var = jnp.sum(c * c, axis=-1, keepdims=True) * inv_h
    x2n = c * jax.lax.rsqrt(var + 1e-5) * gamma_ref[...]  # padded gamma = 0

    # torch.add(x1, x2); beta was pre-folded into x1b.
    s = (x1b + x2n).astype(w_out_ref.dtype)

    # Out projection (bf16 MXU, f32 acc) + stable log-softmax over O_pad lanes.
    # Padded columns: weight 0, bias -1e30 -> exp underflows to 0.
    logits = jnp.dot(s, w_out_ref[...],
                     preferred_element_type=jnp.float32) + b_out_ref[...]
    m = jnp.max(logits, axis=-1, keepdims=True)
    z = logits - m
    lse = jnp.log(jnp.sum(jnp.exp(z), axis=-1, keepdims=True))
    o_ref[...] = (z - lse).astype(o_ref.dtype)


def pack_params(p, mxu_dtype=jnp.bfloat16):
    """One-time packing: fold inl into lin1/lin2, fold beta, lane-pad halves."""
    H = p["w1"].shape[0]
    O = p["w_out"].shape[1]
    H_pad = _round_up(H, _LANE)
    O_pad = _round_up(O, _LANE)

    w12 = jnp.concatenate([p["w1"], p["w2"]], axis=1)                 # (H, 2H)
    wa = jnp.dot(p["w_in"], w12)                                      # (I, 2H)
    ba = jnp.dot(p["b_in"], w12) + jnp.concatenate(
        [p["b1"] + p["beta"], p["b2"]], axis=1)                       # (1, 2H)

    def pad_halves(a):
        a1, a2 = a[:, :H], a[:, H:]
        pc = ((0, 0), (0, H_pad - H))
        return jnp.concatenate([jnp.pad(a1, pc), jnp.pad(a2, pc)], axis=1)

    wa_p = pad_halves(wa)                                             # (I, 2*H_pad)
    ba_p = pad_halves(ba)                                             # (1, 2*H_pad)
    gamma_p = jnp.pad(p["gamma"], ((0, 0), (0, H_pad - H)))           # (1, H_pad)
    w_out_p = jnp.pad(p["w_out"], ((0, H_pad - H), (0, O_pad - O)))   # (H_pad, O_pad)
    b_out_p = jnp.pad(p["b_out"], ((0, 0), (0, O_pad - O)),
                      constant_values=_NEG_BIG)                       # (1, O_pad)

    return dict(
        wa=wa_p.astype(mxu_dtype),
        ba=ba_p.astype(jnp.float32),
        gamma=gamma_p.astype(jnp.float32),
        w_out=w_out_p.astype(mxu_dtype),
        b_out=b_out_p.astype(jnp.float32),
    )


@functools.partial(jax.jit, static_argnames=("hidden_size", "out_size"))
def actor_policy_forward(x, packed, hidden_size, out_size):
    B, I = x.shape
    H_pad = packed["gamma"].shape[1]
    O_pad = packed["w_out"].shape[1]

    TB = min(_TB_MAX, _round_up(B, 8))
    B_pad = _round_up(B, TB)
    if B_pad != B:                      # pad only when actually needed
        x = jnp.pad(x, ((0, B_pad - B), (0, 0)))

    def resident(shape):
        # Constant index_map + single-buffered: VMEM-resident, no 2x buffer.
        return pl.BlockSpec(shape, lambda i: (0, 0),
                            pipeline_mode=pl.Buffered(1))

    kernel = functools.partial(actor_policy_kernel,
                               hidden_size=hidden_size, h_pad=H_pad)
    out = pl.pallas_call(
        kernel,
        out_shape=jax.ShapeDtypeStruct((B_pad, O_pad), jnp.float32),
        grid=(B_pad // TB,),
        in_specs=[
            pl.BlockSpec((TB, I), lambda i: (i, 0)),  # pipelined activation tile
            resident((I, 2 * H_pad)),
            resident((1, 2 * H_pad)),
            resident((1, H_pad)),
            resident((H_pad, O_pad)),
            resident((1, O_pad)),
        ],
        out_specs=pl.BlockSpec((TB, O_pad), lambda i: (i, 0)),
        compiler_params=pltpu.CompilerParams(
            dimension_semantics=("parallel",),
            vmem_limit_bytes=_vmem_limit_bytes(TB, I, H_pad, O_pad),
        ),
    )(x, packed["wa"], packed["ba"], packed["gamma"],
      packed["w_out"], packed["b_out"])

    return out[:B, :out_size]


def init_params(key, inputs_size, hidden_size, out_size):
    """Deterministic synthetic init (PyTorch-style). Weights stored (in, out)."""
    ks = jax.random.split(key, 8)

    def lin(kw, kb, fan_in, fan_out):
        bound = 1.0 / jnp.sqrt(fan_in)
        w = jax.random.uniform(kw, (fan_in, fan_out), jnp.float32, -bound, bound)
        b = jax.random.uniform(kb, (1, fan_out), jnp.float32, -bound, bound)
        return w, b

    w_in, b_in = lin(ks[0], ks[1], inputs_size, hidden_size)
    w1, b1 = lin(ks[2], ks[3], hidden_size, hidden_size)
    w2, b2 = lin(ks[4], ks[5], hidden_size, hidden_size)
    w_out, b_out = lin(ks[6], ks[7], hidden_size, out_size)
    gamma = jnp.ones((1, hidden_size), jnp.float32)
    beta = jnp.zeros((1, hidden_size), jnp.float32)
    return dict(
        w_in=w_in, b_in=b_in, w1=w1, b1=b1, w2=w2, b2=b2,
        w_out=w_out, b_out=b_out, gamma=gamma, beta=beta,
    )


def reference_forward(x, p):
    """Pure-f32 reference mirroring the PyTorch module (eval mode)."""
    f32 = jnp.float32
    h = jnp.dot(x, p["w_in"], preferred_element_type=f32) + p["b_in"]
    x1 = jnp.dot(h, p["w1"], preferred_element_type=f32) + p["b1"]
    x2 = jnp.dot(h, p["w2"], preferred_element_type=f32) + p["b2"]
    mean = jnp.mean(x2, -1, keepdims=True)
    c = x2 - mean
    var = jnp.mean(c * c, -1, keepdims=True)
    x2n = c * jax.lax.rsqrt(var + 1e-5) * p["gamma"] + p["beta"]
    logits = jnp.dot(x1 + x2n, p["w_out"], preferred_element_type=f32) + p["b_out"]
    return jax.nn.log_softmax(logits, axis=-1)


def packed_reference_forward(x, packed, hidden_size, out_size):
    """Pure-JAX mirror of the kernel math (same packing / dtypes / op order)."""
    H_pad = packed["gamma"].shape[1]
    xb = x.astype(packed["wa"].dtype)
    x12 = jnp.dot(xb, packed["wa"],
                  preferred_element_type=jnp.float32) + packed["ba"]
    x1b, x2 = x12[:, :H_pad], x12[:, H_pad:]
    inv_h = 1.0 / hidden_size
    mean = jnp.sum(x2, -1, keepdims=True) * inv_h
    c = x2 - mean
    if hidden_size != H_pad:
        lane = jax.lax.broadcasted_iota(jnp.int32, c.shape, 1)
        c = jnp.where(lane < hidden_size, c, 0.0)
    var = jnp.sum(c * c, -1, keepdims=True) * inv_h
    x2n = c * jax.lax.rsqrt(var + 1e-5) * packed["gamma"]
    s = (x1b + x2n).astype(packed["w_out"].dtype)
    logits = jnp.dot(s, packed["w_out"],
                     preferred_element_type=jnp.float32) + packed["b_out"]
    m = jnp.max(logits, -1, keepdims=True)
    z = logits - m
    lse = jnp.log(jnp.sum(jnp.exp(z), -1, keepdims=True))
    return (z - lse)[:, :out_size]


if __name__ == "__main__":
    inputs_size, hidden_size, out_size = 16, 32, 8
    batch = 8

    key = jax.random.PRNGKey(0)
    k_x, k_p = jax.random.split(key)
    x = jax.random.normal(k_x, (batch, inputs_size), jnp.float32)
    params = init_params(k_p, inputs_size, hidden_size, out_size)

    packed = pack_params(params)
    out = actor_policy_forward(x, packed, hidden_size, out_size)
    out = jax.block_until_ready(out)
    assert out.shape == (batch, out_size)
    assert bool(jnp.all(jnp.isfinite(out)))

    # Tight check: reference mirrors the kernel's packing / precision exactly.
    ref_matched = packed_reference_forward(x, packed, hidden_size, out_size)
    assert jnp.allclose(out, ref_matched, atol=1e-4, rtol=1e-4), \
        "mismatch vs matched-precision reference"

    # Loose semantic check against the pure-f32 module reference
    # (bf16 MXU weights + eval-mode fold of inl into lin1/lin2).
    ref_f32 = reference_forward(x, params)
    assert jnp.allclose(out, ref_f32, atol=1e-1, rtol=1e-2), \
        "mismatch vs f32 reference"

    print("KERNEL_OK")
</pallas_src>

<mosaic_0001>
module attributes {stable_mosaic.version = 11 : i64} {
  func.func @actor_policy_kernel(%arg0: i32, %arg1: memref<8x16xf32, #tpu.memory_space<vmem>>, %arg2: memref<16x256xbf16, #tpu.memory_space<vmem>>, %arg3: memref<1x256xf32, #tpu.memory_space<vmem>>, %arg4: memref<1x128xf32, #tpu.memory_space<vmem>>, %arg5: memref<128x128xbf16, #tpu.memory_space<vmem>>, %arg6: memref<1x128xf32, #tpu.memory_space<vmem>>, %arg7: memref<8x128xf32, #tpu.memory_space<vmem>>) attributes {dimension_semantics = [#tpu.dimension_semantics<parallel>], iteration_bounds = array<i64: 1>, scalar_prefetch = 0 : i64, scratch_operands = 0 : i64, tpu.core_type = #tpu.core_type<tc>, window_params = [{transform_indices = @transform_0, window_bounds = array<i64: 8, 16>}, {pipeline_mode = #tpu.pipeline_mode<synchronous>, transform_indices = @transform_1, window_bounds = array<i64: 16, 256>}, {pipeline_mode = #tpu.pipeline_mode<synchronous>, transform_indices = @transform_2, window_bounds = array<i64: 1, 256>}, {pipeline_mode = #tpu.pipeline_mode<synchronous>, transform_indices = @transform_3, window_bounds = array<i64: 1, 128>}, {pipeline_mode = #tpu.pipeline_mode<synchronous>, transform_indices = @transform_4, window_bounds = array<i64: 128, 128>}, {pipeline_mode = #tpu.pipeline_mode<synchronous>, transform_indices = @transform_5, window_bounds = array<i64: 1, 128>}, {transform_indices = @transform_6, window_bounds = array<i64: 8, 128>}]} {
    %c0 = arith.constant 0 : index
    %c0_0 = arith.constant 0 : index
    %0 = vector.load %arg1[%c0, %c0_0] : memref<8x16xf32, #tpu.memory_space<vmem>>, vector<8x16xf32>
    %1 = arith.truncf %0 : vector<8x16xf32> to vector<8x16xbf16>
    %c0_1 = arith.constant 0 : index
    %c0_2 = arith.constant 0 : index
    %2 = vector.load %arg2[%c0_1, %c0_2] : memref<16x256xbf16, #tpu.memory_space<vmem>>, vector<16x256xbf16>
    %cst = arith.constant dense<0.000000e+00> : vector<8x256xf32>
    %3 = tpu.matmul %1, %2, %cst {dimension_numbers = #tpu.dot_dimension_numbers<[1], [0], [0], [1], [0, 0, 1, 1], [], []>} : vector<8x16xbf16>, vector<16x256xbf16>, vector<8x256xf32> -> vector<8x256xf32>
    %c0_3 = arith.constant 0 : index
    %c0_4 = arith.constant 0 : index
    %4 = vector.load %arg3[%c0_3, %c0_4] : memref<1x256xf32, #tpu.memory_space<vmem>>, vector<1x256xf32>
    %5 = vector.broadcast %4 : vector<1x256xf32> to vector<8x256xf32>
    %6 = arith.addf %3, %5 : vector<8x256xf32>
    %7 = vector.extract_strided_slice %6 {offsets = [0, 0], sizes = [8, 128], strides = [1, 1]} : vector<8x256xf32> to vector<8x128xf32>
    %8 = vector.extract_strided_slice %6 {offsets = [0, 128], sizes = [8, 128], strides = [1, 1]} : vector<8x256xf32> to vector<8x128xf32>
    %cst_5 = arith.constant dense<0.000000e+00> : vector<8xf32>
    %9 = vector.multi_reduction <add>, %8, %cst_5 [1] : vector<8x128xf32> to vector<8xf32>
    %10 = vector.shape_cast %9 : vector<8xf32> to vector<8x1xf32>
    %cst_6 = arith.constant 3.125000e-02 : f32
    %11 = vector.broadcast %cst_6 : f32 to vector<8x1xf32>
    %12 = arith.mulf %10, %11 : vector<8x1xf32>
    %13 = vector.broadcast %12 : vector<8x1xf32> to vector<8x128xf32>
    %14 = arith.subf %8, %13 : vector<8x128xf32>
    %15 = tpu.iota {dimensions = array<i32: 1>} : vector<8x128xi32>
    %c32_i32 = arith.constant 32 : i32
    %16 = vector.broadcast %c32_i32 : i32 to vector<8x128xi32>
    %17 = arith.cmpi slt, %15, %16 : vector<8x128xi32>
    %cst_7 = arith.constant 0.000000e+00 : f32
    %18 = vector.broadcast %cst_7 : f32 to vector<8x128xf32>
    %19 = arith.select %17, %14, %18 : vector<8x128xi1>, vector<8x128xf32>
    %20 = arith.mulf %19, %19 : vector<8x128xf32>
    %cst_8 = arith.constant dense<0.000000e+00> : vector<8xf32>
    %21 = vector.multi_reduction <add>, %20, %cst_8 [1] : vector<8x128xf32> to vector<8xf32>
    %22 = vector.shape_cast %21 : vector<8xf32> to vector<8x1xf32>
    %cst_9 = arith.constant 3.125000e-02 : f32
    %23 = vector.broadcast %cst_9 : f32 to vector<8x1xf32>
    %24 = arith.mulf %22, %23 : vector<8x1xf32>
    %cst_10 = arith.constant 9.99999974E-6 : f32
    %25 = vector.broadcast %cst_10 : f32 to vector<8x1xf32>
    %26 = arith.addf %24, %25 : vector<8x1xf32>
    %27 = math.rsqrt %26 : vector<8x1xf32>
    %28 = vector.broadcast %27 : vector<8x1xf32> to vector<8x128xf32>
    %29 = arith.mulf %19, %28 : vector<8x128xf32>
    %c0_11 = arith.constant 0 : index
    %c0_12 = arith.constant 0 : index
    %30 = vector.load %arg4[%c0_11, %c0_12] : memref<1x128xf32, #tpu.memory_space<vmem>>, vector<1x128xf32>
    %31 = vector.broadcast %30 : vector<1x128xf32> to vector<8x128xf32>
    %32 = arith.mulf %29, %31 : vector<8x128xf32>
    %33 = arith.addf %7, %32 : vector<8x128xf32>
    %34 = arith.truncf %33 : vector<8x128xf32> to vector<8x128xbf16>
    %c0_13 = arith.constant 0 : index
    %c0_14 = arith.constant 0 : index
    %35 = vector.load %arg5[%c0_13, %c0_14] : memref<128x128xbf16, #tpu.memory_space<vmem>>, vector<128x128xbf16>
    %cst_15 = arith.constant dense<0.000000e+00> : vector<8x128xf32>
    %36 = tpu.matmul %34, %35, %cst_15 {dimension_numbers = #tpu.dot_dimension_numbers<[1], [0], [0], [1], [0, 0, 1, 1], [], []>} : vector<8x128xbf16>, vector<128x128xbf16>, vector<8x128xf32> -> vector<8x128xf32>
    %c0_16 = arith.constant 0 : index
    %c0_17 = arith.constant 0 : index
    %37 = vector.load %arg6[%c0_16, %c0_17] : memref<1x128xf32, #tpu.memory_space<vmem>>, vector<1x128xf32>
    %38 = vector.broadcast %37 : vector<1x128xf32> to vector<8x128xf32>
    %39 = arith.addf %36, %38 : vector<8x128xf32>
    %cst_18 = arith.constant dense<0xFF800000> : vector<8xf32>
    %40 = vector.multi_reduction <maximumf>, %39, %cst_18 [1] : vector<8x128xf32> to vector<8xf32>
    %41 = vector.shape_cast %40 : vector<8xf32> to vector<8x1xf32>
    %42 = vector.broadcast %41 : vector<8x1xf32> to vector<8x128xf32>
    %43 = arith.subf %39, %42 : vector<8x128xf32>
    %44 = math.exp %43 : vector<8x128xf32>
    %cst_19 = arith.constant dense<0.000000e+00> : vector<8xf32>
    %45 = vector.multi_reduction <add>, %44, %cst_19 [1] : vector<8x128xf32> to vector<8xf32>
    %46 = vector.shape_cast %45 : vector<8xf32> to vector<8x1xf32>
    %47 = math.log %46 : vector<8x1xf32>
    %48 = vector.broadcast %47 : vector<8x1xf32> to vector<8x128xf32>
    %49 = arith.subf %43, %48 : vector<8x128xf32>
    %c0_20 = arith.constant 0 : index
    %c0_21 = arith.constant 0 : index
    %50 = vector.load %arg7[%c0_20, %c0_21] : memref<8x128xf32, #tpu.memory_space<vmem>>, vector<8x128xf32>
    tpu.vector_store %arg7[%c0_20, %c0_21], %49 {strides = array<i32>} : memref<8x128xf32, #tpu.memory_space<vmem>>, vector<8x128xf32>,
    return
  }
  func.func @transform_0(%arg0: i32) -> (i32, i32) {
    %c0_i32 = arith.constant 0 : i32
    %c0_i32_0 = arith.constant 0 : i32
    return %arg0, %c0_i32 : i32, i32
  }
  func.func @transform_1(%arg0: i32) -> (i32, i32) {
    %c0_i32 = arith.constant 0 : i32
    %c0_i32_0 = arith.constant 0 : i32
    %c0_i32_1 = arith.constant 0 : i32
    return %c0_i32, %c0_i32_0 : i32, i32
  }
  func.func @transform_2(%arg0: i32) -> (i32, i32) {
    %c0_i32 = arith.constant 0 : i32
    %c0_i32_0 = arith.constant 0 : i32
    %c0_i32_1 = arith.constant 0 : i32
    return %c0_i32, %c0_i32_0 : i32, i32
  }
  func.func @transform_3(%arg0: i32) -> (i32, i32) {
    %c0_i32 = arith.constant 0 : i32
    %c0_i32_0 = arith.constant 0 : i32
    %c0_i32_1 = arith.constant 0 : i32
    return %c0_i32, %c0_i32_0 : i32, i32
  }
  func.func @transform_4(%arg0: i32) -> (i32, i32) {
    %c0_i32 = arith.constant 0 : i32
    %c0_i32_0 = arith.constant 0 : i32
    %c0_i32_1 = arith.constant 0 : i32
    return %c0_i32, %c0_i32_0 : i32, i32
  }
  func.func @transform_5(%arg0: i32) -> (i32, i32) {
    %c0_i32 = arith.constant 0 : i32
    %c0_i32_0 = arith.constant 0 : i32
    %c0_i32_1 = arith.constant 0 : i32
    return %c0_i32, %c0_i32_0 : i32, i32
  }
  func.func @transform_6(%arg0: i32) -> (i32, i32) {
    %c0_i32 = arith.constant 0 : i32
    %c0_i32_0 = arith.constant 0 : i32
    return %arg0, %c0_i32 : i32, i32
  }
}

</mosaic_0001>

<llo_original>
// kernel: actor_policy_forward.1
$region0: #{actor_policy_forward.1}
  #allocation0 [shape = 'u32[]', space=smem, size = 0x4, offset = 0x4, fixed_abs, tag = 'smem constant byte address 0x4 - core index']
  #allocation1 [shape = 'u32[144,128]{1,0:T(1,128)}', space=vmem, size = 0x12000, scoped, tag = 'internal scratch']
  %s0 = inlined_call_operand.hbm [shape: f32[8,16], index: 0, kind: input, shape index: {}]
  %s1 = inlined_call_operand.vmem [shape: bf16[16,256], index: 1, kind: input, shape index: {}]
  %s2 = inlined_call_operand.vmem [shape: f32[1,256], index: 2, kind: input, shape index: {}]
  %s3 = inlined_call_operand.hbm [shape: f32[1,128], index: 3, kind: input, shape index: {}]
  %s4 = inlined_call_operand.hbm [shape: bf16[128,128], index: 4, kind: input, shape index: {}]
  %s5 = inlined_call_operand.hbm [shape: f32[1,128], index: 5, kind: input, shape index: {}]
  %s6 = inlined_call_operand.hbm [shape: f32[8,128], index: 6, kind: output, shape index: {}]
  %s7 = sld [smem:[#allocation0]]
  $region50: #{actor_policy_forward.1} parent=0
    _
  %s9 = ssub.s32 1, %s7
  %s10 = scalar_select 0, %s9, %s7
  $region1: #{actor_policy_forward.1} parent=0
    #allocation2 [shape = 'u8[4096]{0}', space=vmem, size = 0x1000, scoped, tag = 'input window, operand 0, single buffered']
    #allocation3 [shape = 's32[1]{0}', space=sflag, size = 0x4, scoped, tag = 'scoped memory for actor_policy_forward.1']
    #allocation4 [shape = 's32[1]{0}', space=sflag, size = 0x4, scoped, tag = 'scoped memory for actor_policy_forward.1']
    #allocation5 [shape = 'u8[512]{0}', space=vmem, size = 0x400, scoped, tag = 'input window, operand 3, single buffered']
    #allocation6 [shape = 's32[1]{0}', space=sflag, size = 0x4, scoped, tag = 'scoped memory for actor_policy_forward.1']
    #allocation7 [shape = 'u8[32768]{0}', space=vmem, size = 0x8000, scoped, tag = 'input window, operand 4, single buffered']
    #allocation8 [shape = 'u8[512]{0}', space=vmem, size = 0x400, scoped, tag = 'input window, operand 5, single buffered']
    #allocation9 [shape = 's32[1]{0}', space=sflag, size = 0x4, scoped, tag = 'scoped memory for actor_policy_forward.1']
    #allocation10 [shape = 'u8[4096]{0}', space=vmem, size = 0x1000, scoped, tag = 'output window, operand 0, single buffered']
    %11 = vsyncpa [#allocation3], 0
    %12 = vsyncpa [#allocation6], 0
    %13 = vsyncpa [#allocation9], 0
    %14 = vsyncpa [#allocation4], 0
    // Predicated region
    $region2: #{actor_policy_forward.1} parent=1 // pred_check
      _
    $region3: #{actor_policy_forward.1} parent=1 // pred_check_branch
      %16 = sbr.rel (0) target = $region5
    $region4: #{actor_policy_forward.1} parent=1 // pred_region
      %s18 = ssub.s32 128, 128
      %19 = vsyncadd [#allocation3], %s18
      %s21 = sshll.u32 [#allocation2], 4
      %s22 = int_to_ptr.vmem [resolvable:$true] %s21
      %24 = dma.hbm_to_vmem [thread:$0]  %s0, 128, %s22, [#allocation3]
    $region5: #{actor_policy_forward.1} parent=1 // pred_fallthru
      _
    // Predicated region
    $region6: #{actor_policy_forward.1} parent=1 // pred_check
      _
    $region7: #{actor_policy_forward.1} parent=1 // pred_check_branch
      %26 = sbr.rel (0) target = $region9
    $region8: #{actor_policy_forward.1} parent=1 // pred_region
      _
    $region9: #{actor_policy_forward.1} parent=1 // pred_fallthru
      _
    // Predicated region
    $region10: #{actor_policy_forward.1} parent=1 // pred_check
      _
    $region11: #{actor_policy_forward.1} parent=1 // pred_check_branch
      %28 = sbr.rel (0) target = $region13
    $region12: #{actor_policy_forward.1} parent=1 // pred_region
      _
    $region13: #{actor_policy_forward.1} parent=1 // pred_fallthru
      _
    // Predicated region
    $region14: #{actor_policy_forward.1} parent=1 // pred_check
      _
    $region15: #{actor_policy_forward.1} parent=1 // pred_check_branch
      %30 = sbr.rel (0) target = $region17
    $region16: #{actor_policy_forward.1} parent=1 // pred_region
      %s32 = ssub.s32 16, 16
      %33 = vsyncadd [#allocation6], %s32
      %s35 = sshll.u32 [#allocation5], 4
      %s36 = int_to_ptr.vmem [resolvable:$true] %s35
      %38 = dma.hbm_to_vmem [thread:$0]  %s3, 16, %s36, [#allocation6]
    $region17: #{actor_policy_forward.1} parent=1 // pred_fallthru
      _
    // Predicated region
    $region18: #{actor_policy_forward.1} parent=1 // pred_check
      _
    $region19: #{actor_policy_forward.1} parent=1 // pred_check_branch
      %40 = sbr.rel (0) target = $region21
    $region20: #{actor_policy_forward.1} parent=1 // pred_region
      %s42 = ssub.s32 1024, 1024
      %43 = vsyncadd [#allocation6], %s42
      %s44 = sshll.u32 [#allocation7], 4
      %s45 = int_to_ptr.vmem [resolvable:$true] %s44
      %50 = dma.hbm_to_vmem [thread:$0]  %s4, 1024, %s45, [#allocation6], 64, 64, 4
    $region21: #{actor_policy_forward.1} parent=1 // pred_fallthru
      _
    // Predicated region
    $region22: #{actor_policy_forward.1} parent=1 // pred_check
      _
    $region23: #{actor_policy_forward.1} parent=1 // pred_check_branch
      %52 = sbr.rel (0) target = $region25
    $region24: #{actor_policy_forward.1} parent=1 // pred_region
      %s54 = ssub.s32 16, 16
      %55 = vsyncadd [#allocation9], %s54
      %s57 = sshll.u32 [#allocation8], 4
      %s58 = int_to_ptr.vmem [resolvable:$true] %s57
      %60 = dma.hbm_to_vmem [thread:$0]  %s5, 16, %s58, [#allocation9]
    $region25: #{actor_policy_forward.1} parent=1 // pred_fallthru
      _
    // Predicated region
    $region26: #{actor_policy_forward.1} parent=1 // pred_check
      _
    $region27: #{actor_policy_forward.1} parent=1 // pred_check_branch
      %62 = sbr.rel (0) target = $region29
    $region28: #{actor_policy_forward.1} parent=1 // pred_region
      %63 = dma.done [#allocation3], 128
    $region29: #{actor_policy_forward.1} parent=1 // pred_fallthru
      _
    // Predicated region
    $region30: #{actor_policy_forward.1} parent=1 // pred_check
      _
    $region31: #{actor_policy_forward.1} parent=1 // pred_check_branch
      %65 = sbr.rel (0) target = $region33
    $region32: #{actor_policy_forward.1} parent=1 // pred_region
      %66 = dma.done [#allocation6], 16
    $region33: #{actor_policy_forward.1} parent=1 // pred_fallthru
      _
    // Predicated region
    $region34: #{actor_policy_forward.1} parent=1 // pred_check
      _
    $region35: #{actor_policy_forward.1} parent=1 // pred_check_branch
      %68 = sbr.rel (0) target = $region37
    $region36: #{actor_policy_forward.1} parent=1 // pred_region
      %69 = dma.done [#allocation6], 1024
    $region37: #{actor_policy_forward.1} parent=1 // pred_fallthru
      _
    // Predicated region
    $region38: #{actor_policy_forward.1} parent=1 // pred_check
      _
    $region39: #{actor_policy_forward.1} parent=1 // pred_check_branch
      %71 = sbr.rel (0) target = $region41
    $region40: #{actor_policy_forward.1} parent=1 // pred_region
      %72 = dma.done [#allocation9], 16
    $region41: #{actor_policy_forward.1} parent=1 // pred_fallthru
      _
    %v74 = vld [vmem:[#allocation2] sm:$0xff]
    %v75 = vpack.c.bf16 %v74, %v74
    %v76 = vld [vmem:[%s1] sm:$0xff]
    %v77 = vld [vmem:[%s1 + $0x8] sm:$0xff]
    %v78 = vld [vmem:[%s2] sm:$0x3]
    %v80 = vlaneseq
    %v81 = vshrl.u32 %v80, 7
    %v82 = vsub.s32 0, %v81
    %v83 = vrot.slane %v78, %v82
    %v84 = vlaneseq
    %v85 = vshrl.u32 %v84, 7
    %v86 = vsub.s32 1, %v85
    %v87 = vrot.slane %v78, %v86
    %v92 = vunpack.c.l.b16 %v76
    %v93 = vunpack.c.h.b16 %v76
    %v94 = vunpack.c.l.b16 %v77
    %v95 = vunpack.c.h.b16 %v77
    %v96 = vpack.c.b16 %v94, %v92
    %v97 = vpack.c.b16 %v95, %v93
    %vm100 = vcmask 130048
    %v102 = vsel %vm100, %v75, 0
    %104 = vmatprep.subr.bf16.mxu0 %v97
    %105 = vmatpush1.bf16.msra.mxu0 %v96
    %106 = vmatprep.subr.bf16.mxu0 0
    %107 = vmatpush1.bf16.msra.mxu0 0
    %108 = vmatprep.subr.bf16.mxu0 0
    %109 = vmatpush1.bf16.msra.mxu0 0
    %110 = vmatprep.subr.bf16.mxu0 0
    %111 = vmatpush1.bf16.msra.mxu0 0
    %112 = vmatprep.subr.bf16.mxu0 0
    %113 = vmatpush1.bf16.msra.mxu0 0
    %114 = vmatprep.subr.bf16.mxu0 0
    %115 = vmatpush1.bf16.msra.mxu0 0
    %116 = vmatprep.subr.bf16.mxu0 0
    %117 = vmatpush1.bf16.msra.mxu0 0
    %118 = vmatprep.subr.bf16.mxu0 0
    %119 = vmatpush1.bf16.msra.mxu0 0
    %120 = vmatprep.subr.bf16.mxu0 0
    %121 = vmatpush1.bf16.msra.mxu0 0
    %122 = vmatprep.subr.bf16.mxu0 0
    %123 = vmatpush1.bf16.msra.mxu0 0
    %124 = vmatprep.subr.bf16.mxu0 0
    %125 = vmatpush1.bf16.msra.mxu0 0
    %126 = vmatprep.subr.bf16.mxu0 0
    %127 = vmatpush1.bf16.msra.mxu0 0
    %128 = vmatprep.subr.bf16.mxu0 0
    %129 = vmatpush1.bf16.msra.mxu0 0
    %130 = vmatprep.subr.bf16.mxu0 0
    %131 = vmatpush1.bf16.msra.mxu0 0
    %132 = vmatprep.subr.bf16.mxu0 0
    %133 = vmatpush1.bf16.msra.mxu0 0
    %134 = vmatprep.subr.bf16.mxu0 0
    %135 = vmatpush1.bf16.msra.mxu0 0
    %136 = vmatprep.mubr.bf16.mxu0 0
    %137 = vmatmul.mubr.bf16.gmra.mrb[0].mxu0 %v102
    %v138 = vpop.f32.mrb[0].mxu0
    %v139 = vadd.f32 %v83, %v138
    %v140 = vpop.f32.mrb[0].mxu0
    %v141 = vadd.f32 %v87, %v140
    %v142 = vpop.f32.mrb[0].mxu0
    %v143 = vpop.f32.mrb[0].mxu0
    %144 = vdwg.mxu0
    %145 = vadd.xlane.f32.xlu0 %v141
    %v146 = vpop.xlane.xlu0 %145
    %v147 = vmul.f32 %v146, 0.03125
    %v148 = vsub.f32 %v141, %v147
    %v149 = vlaneseq
    %v150 = vand.u32 %v149, 127
    %vm151 = vcmp.lt.s32.totalorder %v150, 32
    %v152 = vsel %vm151, %v148, 0.0
    %v153 = vmul.f32 %v152, %v152
    %154 = vadd.xlane.f32.xlu0 %v153
    %v155 = vpop.xlane.xlu0 %154
    %v156 = vmul.f32 %v155, 0.03125
    %v157 = vadd.f32 %v156, 1e-05
    %v158 = vrsqrt.pop %v157
    %v159 = vmul.f32 %v152, %v158
    %v160 = vld [vmem:[#allocation5] sm:$0x1]
    %v162 = vlaneseq
    %v163 = vshrl.u32 %v162, 7
    %v164 = vsub.s32 0, %v163
    %v165 = vrot.slane %v160, %v164
    %v167 = vmul.f32 %v159, %v165
    %v168 = vadd.f32 %v139, %v167
    %v169 = vpack.c.bf16 %v168, %v168
    %v170 = vld [vmem:[#allocation7] sm:$0xf]
    %v171 = vld [vmem:[#allocation7 + $0x4] sm:$0xf]
    %v172 = vld [vmem:[#allocation7 + $0x8] sm:$0xf]
    %v173 = vld [vmem:[#allocation7 + $0xc] sm:$0xf]
    %v174 = vld [vmem:[#allocation7 + $0x10] sm:$0xf]
    %v175 = vld [vmem:[#allocation7 + $0x14] sm:$0xf]
    %v176 = vld [vmem:[#allocation7 + $0x18] sm:$0xf]
    %v177 = vld [vmem:[#allocation7 + $0x1c] sm:$0xf]
    %v178 = vld [vmem:[#allocation7 + $0x20] sm:$0xf]
    %v179 = vld [vmem:[#allocation7 + $0x24] sm:$0xf]
    %v180 = vld [vmem:[#allocation7 + $0x28] sm:$0xf]
    %v181 = vld [vmem:[#allocation7 + $0x2c] sm:$0xf]
    %v182 = vld [vmem:[#allocation7 + $0x30] sm:$0xf]
    %v183 = vld [vmem:[#allocation7 + $0x34] sm:$0xf]
    %v184 = vld [vmem:[#allocation7 + $0x38] sm:$0xf]
    %v185 = vld [vmem:[#allocation7 + $0x3c] sm:$0xf]
    %v186 = vld [vmem:[#allocation8] sm:$0x1]
    %v188 = vlaneseq
    %v189 = vshrl.u32 %v188, 7
    %v190 = vsub.s32 0, %v189
    %v191 = vrot.slane %v186, %v190
    %v209 = vunpack.c.l.b16 %v170
    %v210 = vunpack.c.l.b16 %v171
    %v211 = vunpack.c.l.b16 %v172
    %v212 = vunpack.c.l.b16 %v173
    %v213 = vunpack.c.l.b16 %v174
    %v214 = vunpack.c.l.b16 %v175
    %v215 = vunpack.c.l.b16 %v176
    %v216 = vunpack.c.l.b16 %v177
    %v217 = vunpack.c.l.b16 %v178
    %v218 = vunpack.c.l.b16 %v179
    %v219 = vunpack.c.l.b16 %v180
    %v220 = vunpack.c.l.b16 %v181
    %v221 = vunpack.c.l.b16 %v182
    %v222 = vunpack.c.l.b16 %v183
    %v223 = vunpack.c.l.b16 %v184
    %v224 = vunpack.c.l.b16 %v185
    %v225 = vpack.c.b16 %v210, %v209
    %v226 = vpack.c.b16 %v212, %v211
    %v227 = vpack.c.b16 %v214, %v213
    %v228 = vpack.c.b16 %v216, %v215
    %v229 = vpack.c.b16 %v218, %v217
    %v230 = vpack.c.b16 %v220, %v219
    %v231 = vpack.c.b16 %v222, %v221
    %v232 = vpack.c.b16 %v224, %v223
    %241 = vmatprep.subr.bf16.mxu0 0
    %242 = vmatpush1.bf16.msra.mxu0 %v225
    %243 = vmatprep.subr.bf16.mxu0 0
    %244 = vmatpush1.bf16.msra.mxu0 %v226
    %245 = vmatprep.subr.bf16.mxu0 0
    %246 = vmatpush1.bf16.msra.mxu0 %v227
    %247 = vmatprep.subr.bf16.mxu0 0
    %248 = vmatpush1.bf16.msra.mxu0 %v228
    %249 = vmatprep.subr.bf16.mxu0 0
    %250 = vmatpush1.bf16.msra.mxu0 %v229
    %251 = vmatprep.subr.bf16.mxu0 0
    %252 = vmatpush1.bf16.msra.mxu0 %v230
    %253 = vmatprep.subr.bf16.mxu0 0
    %254 = vmatpush1.bf16.msra.mxu0 %v231
    %255 = vmatprep.subr.bf16.mxu0 0
    %256 = vmatpush1.bf16.msra.mxu0 %v232
    %257 = vmatprep.subr.bf16.mxu0 0
    %258 = vmatpush1.bf16.msra.mxu0 0
    %259 = vmatprep.subr.bf16.mxu0 0
    %260 = vmatpush1.bf16.msra.mxu0 0
    %261 = vmatprep.subr.bf16.mxu0 0
    %262 = vmatpush1.bf16.msra.mxu0 0
    %263 = vmatprep.subr.bf16.mxu0 0
    %264 = vmatpush1.bf16.msra.mxu0 0
    %265 = vmatprep.subr.bf16.mxu0 0
    %266 = vmatpush1.bf16.msra.mxu0 0
    %267 = vmatprep.subr.bf16.mxu0 0
    %268 = vmatpush1.bf16.msra.mxu0 0
    %269 = vmatprep.subr.bf16.mxu0 0
    %270 = vmatpush1.bf16.msra.mxu0 0
    %271 = vmatprep.subr.bf16.mxu0 0
    %272 = vmatpush1.bf16.msra.mxu0 0
    %273 = vmatprep.mubr.bf16.mxu0 0
    %274 = vmatmul.mubr.bf16.gmra.mrb[0].mxu0 %v169
    %v275 = vpop.f32.mrb[0].mxu0
    %v276 = vadd.f32 %v191, %v275
    %v277 = vpop.f32.mrb[0].mxu0
    %v278 = vpop.f32.mrb[0].mxu0
    %v279 = vpop.f32.mrb[0].mxu0
    %280 = vdwg.mxu0
    %281 = vmax.xlane.f32.xlu0 %v276
    %v282 = vpop.xlane.xlu0 %281
    %v283 = vsub.f32 %v276, %v282
    %v284 = vmul.f32 %v283, 1.442695
    %v285 = vpow.pop %v284
    %286 = vadd.xlane.f32.xlu0 %v285
    %v287 = vpop.xlane.xlu0 %286
    %v288 = vlog2.pop %v287
    %v289 = vmul.f32 %v288, 0.6931472
    %v290 = vsub.f32 %v283, %v289
    %291 = vst [vmem:[#allocation10] sm:$0xff] %v290
    // Predicated region
    $region42: #{actor_policy_forward.1} parent=1 // pred_check
      _
    $region43: #{actor_policy_forward.1} parent=1 // pred_check_branch
      %293 = sbr.rel (0) target = $region45
    $region44: #{actor_policy_forward.1} parent=1 // pred_region
      %s295 = ssub.s32 128, 128
      %296 = vsyncadd [#allocation4], %s295
      %s298 = sshll.u32 [#allocation10], 4
      %s299 = int_to_ptr.vmem [resolvable:$true] %s298
      %301 = dma.vmem_to_hbm [thread:$0]  %s299, 128, %s6, [#allocation4]
    $region45: #{actor_policy_forward.1} parent=1 // pred_fallthru
      _
    // Predicated region
    $region46: #{actor_policy_forward.1} parent=1 // pred_check
      _
    $region47: #{actor_policy_forward.1} parent=1 // pred_check_branch
      %303 = sbr.rel (0) target = $region49
    $region48: #{actor_policy_forward.1} parent=1 // pred_region
      %304 = dma.done [#allocation4], 128
    $region49: #{actor_policy_forward.1} parent=1 // pred_fallthru
      _
    %305 = vsyncpa [#allocation3], 1
    %306 = vsyncpa [#allocation6], 1
    %307 = vsyncpa [#allocation9], 1
    %308 = vsyncpa [#allocation4], 1

</llo_original>
